<compile_context>
chip_gen: v7x
topology: tpu7x:2x2x1
jax: 0.10.0
libtpu: 0.0.40
codegen_flags: <defaults>
</compile_context>

<pallas_src>
import functools

import jax
import jax.numpy as jnp
from jax import lax
from jax.experimental import pallas as pl
from jax.experimental.pallas import tpu as pltpu

K = 17                     # ConvModule default depthwise kernel size
PAD = (K - 1) // 2         # 'same' padding (= 8)
EPS = 1e-5                 # nn.LayerNorm default eps
CW_ROWS = 24               # conv taps padded to a sublane multiple (17 -> 24)


def _round_up(n, m):
    return (n + m - 1) // m * m


def _const_spec(block_shape):
    """BlockSpec for a grid-invariant input; single-buffered when supported."""
    index_map = lambda bi, ji: (0,) * len(block_shape)
    try:
        return pl.BlockSpec(block_shape, index_map, pipeline_mode=pl.Buffered(1))
    except TypeError:                      # older JAX without pipeline_mode
        return pl.BlockSpec(block_shape, index_map)


def ffconvm_kernel(xm_ref, xh_ref, g_ref, bln_ref, w_ref, b_ref, cw_ref,
                   o_ref, h_ref, *, true_t, true_din, din_p, t_tile, c_rows):
    # xm_ref : (1, t_tile, Din_p) f32   -- this tile's own rows
    # xh_ref : (1, 1, 2*PAD, Din_p) f32 -- left halo rows | right halo rows
    # g_ref, bln_ref : (1, Din_p) f32      w_ref : (Din_p, Dout_p) bf16
    # b_ref : (1, Dout_p) f32              cw_ref: (CW_ROWS, Dout_p) f32 (residual folded at row PAD)
    # o_ref : (1, t_tile, Dout_p) f32      h_ref : (W, Dout_p) f32 VMEM scratch, W = t_tile + 2*PAD
    j = pl.program_id(1)
    row0 = j * t_tile                                # global row of first main row

    gamma = g_ref[...]
    beta = bln_ref[...]
    wmat = w_ref[...]
    bvec = b_ref[...]

    inv_n = 1.0 / true_din
    pad_cols = float(din_p - true_din)               # zero-padded channel columns

    def ln_linear_silu(xblk):                        # (R, Din_p) f32 -> (R, Dout_p) f32
        # mean-shifted two-pass LayerNorm; padded channels corrected analytically
        mu = jnp.sum(xblk, axis=-1, keepdims=True) * inv_n
        xc = xblk - mu
        s2 = jnp.sum(xc * xc, axis=-1, keepdims=True)
        if pad_cols:
            s2 = s2 - pad_cols * (mu * mu)
        var = jnp.maximum(s2 * inv_n, 0.0)
        xn = xc * lax.rsqrt(var + EPS)
        xn = xn * gamma + beta
        # Linear on the MXU: bf16 operands, f32 accumulation.
        h = jnp.dot(xn.astype(jnp.bfloat16), wmat,
                    preferred_element_type=jnp.float32) + bvec
        return h * jax.nn.sigmoid(h)                 # SiLU

    # ---- LN + Linear + SiLU on the tile's own rows; zero rows past the true T ----
    hm = ln_linear_silu(xm_ref[0])                                       # (t_tile, Dout_p)
    gi = lax.broadcasted_iota(jnp.int32, (t_tile, 1), 0) + row0
    h_ref[PAD:PAD + t_tile, :] = jnp.where(gi < true_t, hm, 0.0)

    # ---- recompute the 2*PAD halo rows (tiny); zero rows outside [0, T) ----
    hh = ln_linear_silu(xh_ref[0, 0])                                    # (2*PAD, Dout_p)
    li = lax.broadcasted_iota(jnp.int32, (PAD, 1), 0) + (row0 - PAD)
    h_ref[0:PAD, :] = jnp.where(li >= 0, hh[0:PAD], 0.0)
    ri = lax.broadcasted_iota(jnp.int32, (PAD, 1), 0) + (row0 + t_tile)
    h_ref[PAD + t_tile:PAD + t_tile + PAD, :] = jnp.where(ri < true_t, hh[PAD:], 0.0)

    # ---- depthwise conv along T (residual folded into the center tap), row-chunked ----
    # out[i] = sum_k cw[k] * h_window[i + k].  Taps decomposed as k = 8*q + r:
    # one roll per r in 1..7 (XLU), sublane-aligned slices for the 8-aligned part.
    cw = cw_ref[...]                                                     # (CW_ROWS, Dout_p)
    wc = c_rows + 2 * PAD
    for c in range(t_tile // c_rows):
        base = c * c_rows
        win = h_ref[base:base + wc, :]                                   # (wc, Dout_p)
        # r = 0 : taps k = 0, 8, 16 -- aligned slices, no roll
        acc = win[0:c_rows] * cw[0:1]
        acc = acc + win[PAD:PAD + c_rows] * cw[PAD:PAD + 1]
        acc = acc + win[2 * PAD:2 * PAD + c_rows] * cw[2 * PAD:2 * PAD + 1]
        # r = 1..7 : taps k = r and k = r + 8
        for r in range(1, PAD):
            wr = pltpu.roll(win, shift=wc - r, axis=0)                   # wr[i] = win[i + r]
            acc = acc + wr[0:c_rows] * cw[r:r + 1]
            acc = acc + wr[PAD:PAD + c_rows] * cw[PAD + r:PAD + r + 1]
        o_ref[0, base:base + c_rows, :] = acc

    # TODO(synk): training-mode Dropout(0.1) (stateful PRNG mask) not implemented; eval-mode identity.


def prepare_ffconvm_params(ln_g, ln_b, w, b, conv_w):
    """Pad / cast FFConvM parameters once, outside the per-call path.

    conv_w is the depthwise Conv1d weight as (K, dim_out), i.e. PyTorch's
    (dim_out, 1, K) weight transposed.
    """
    din, dout = w.shape
    din_p, dout_p = _round_up(din, 128), _round_up(dout, 128)
    cw_eff = conv_w.at[PAD].add(1.0)        # fold the `y + conv(y)` residual into the center tap
    return dict(
        din=din, dout=dout, din_p=din_p, dout_p=dout_p,
        gamma=jnp.pad(ln_g, (0, din_p - din)).reshape(1, din_p).astype(jnp.float32),
        beta=jnp.pad(ln_b, (0, din_p - din)).reshape(1, din_p).astype(jnp.float32),
        w=jnp.pad(w, ((0, din_p - din), (0, dout_p - dout))).astype(jnp.bfloat16),
        b=jnp.pad(b, (0, dout_p - dout)).reshape(1, dout_p).astype(jnp.float32),
        cw=jnp.pad(cw_eff, ((0, CW_ROWS - K), (0, dout_p - dout))).astype(jnp.float32),
    )


def ffconvm(x, params, *, t_tile=None):
    """x: (B, T, dim_in) f32 -> (B, T, dim_out) f32 (FFConvM forward, eval mode)."""
    B, T, din = x.shape
    assert din == params["din"]
    din_p, dout_p, dout = params["din_p"], params["dout_p"], params["dout"]

    # ---- tile-size / conv-chunk selection ----
    if t_tile is None:
        row_bytes = 4 * (3 * din_p + 4 * dout_p)            # rough per-row VMEM footprint
        t_tile = max(64, min(512, (24 << 20) // max(row_bytes, 1)))
        if B == 1:                                          # keep >= 2 programs (v7x megacore)
            t_tile = min(t_tile, _round_up(pl.cdiv(T, 2), 8))
    t_tile = max(8, _round_up(min(t_tile, _round_up(T, 8)), 8))
    c_rows = 32 if dout_p <= 256 else 16                    # conv row-chunk working set
    c_rows = min(c_rows, t_tile)
    t_tile = _round_up(t_tile, c_rows)
    Tp = _round_up(T, t_tile)
    nT = Tp // t_tile
    W = t_tile + 2 * PAD

    # ---- pad activations once (only when needed; single extra pass over x at most) ----
    if Tp != T or din_p != din:
        xp = jnp.pad(x, ((0, 0), (0, Tp - T), (0, din_p - din)))
    else:
        xp = x

    # Tiny per-tile halo side input: 2*PAD rows per tile (left | right).  Out-of-range
    # rows are clamped here and zeroed inside the kernel by the validity mask.
    offs = jnp.concatenate([jnp.arange(-PAD, 0), jnp.arange(t_tile, t_tile + PAD)])
    idx = jnp.clip(jnp.arange(nT)[:, None] * t_tile + offs[None, :], 0, Tp - 1)   # (nT, 2*PAD)
    x_halo = xp[:, idx, :]                                                         # (B, nT, 2*PAD, Din_p)

    kernel = functools.partial(ffconvm_kernel, true_t=T, true_din=din, din_p=din_p,
                               t_tile=t_tile, c_rows=c_rows)

    # VMEM budget from actual buffer math (+ slack for compiler temporaries).
    est = (2 * (t_tile + 2 * PAD) * din_p * 4               # x tile + halo (double buffered)
           + 2 * t_tile * dout_p * 4                        # output tile (double buffered)
           + din_p * dout_p * 2                             # bf16 weight (single buffered)
           + (2 * din_p + (CW_ROWS + 2) * dout_p) * 4       # small params
           + W * dout_p * 4                                 # h scratch
           + W * (6 * din_p + 4 * dout_p)                   # xn (f32+bf16), hm temporaries
           + 6 * (c_rows + 2 * PAD) * dout_p * 4)           # conv chunk working set
    vmem_limit = int(min(64 << 20, max(32 << 20, int(est * 1.4) + (4 << 20))))

    out = pl.pallas_call(
        kernel,
        out_shape=jax.ShapeDtypeStruct((B, Tp, dout_p), jnp.float32),
        grid_spec=pltpu.PrefetchScalarGridSpec(
            num_scalar_prefetch=0,
            grid=(B, nT),
            in_specs=[
                pl.BlockSpec((1, t_tile, din_p), lambda bi, ji: (bi, ji, 0)),
                pl.BlockSpec((1, 1, 2 * PAD, din_p), lambda bi, ji: (bi, ji, 0, 0)),
                _const_spec((1, din_p)),            # LN gamma
                _const_spec((1, din_p)),            # LN beta
                _const_spec((din_p, dout_p)),       # Linear weight (bf16)
                _const_spec((1, dout_p)),           # Linear bias
                _const_spec((CW_ROWS, dout_p)),     # conv taps (+ residual in center tap)
            ],
            out_specs=pl.BlockSpec((1, t_tile, dout_p), lambda bi, ji: (bi, ji, 0)),
            scratch_shapes=[pltpu.VMEM((W, dout_p), jnp.float32)],
        ),
        compiler_params=pltpu.CompilerParams(
            dimension_semantics=("parallel", "parallel"),
            vmem_limit_bytes=vmem_limit,
        ),
    )(xp, x_halo, params["gamma"], params["beta"], params["w"], params["b"], params["cw"])

    # TODO(synk): for very large dim_out (>=1024 padded) add a Dout grid axis instead of
    # one monolithic weight block; not needed at these sizes.
    if Tp != T or dout_p != dout:
        out = out[:, :T, :dout]
    return out


def ffconvm_reference(x, ln_g, ln_b, w, b, conv_w):
    # Pure-JAX reference (matmul in bf16 to mirror the kernel's MXU path).
    mu = x.mean(-1, keepdims=True)
    var = ((x - mu) ** 2).mean(-1, keepdims=True)
    xn = (x - mu) / jnp.sqrt(var + EPS) * ln_g + ln_b
    h = jnp.dot(xn.astype(jnp.bfloat16), w.astype(jnp.bfloat16),
                preferred_element_type=jnp.float32) + b
    h = h * jax.nn.sigmoid(h)
    T = x.shape[1]
    hp = jnp.pad(h, ((0, 0), (PAD, PAD), (0, 0)))
    conv = sum(hp[:, k:k + T, :] * conv_w[k] for k in range(K))
    return h + conv


if __name__ == "__main__":
    B, T, dim_in, dim_out = 2, 16, 32, 64

    key = jax.random.PRNGKey(0)
    kx, kg, kb, kw, kwb, kc = jax.random.split(key, 6)

    x = jax.random.normal(kx, (B, T, dim_in), dtype=jnp.float32)

    # Synthetic parameters (shapes match nn.LayerNorm / nn.Linear / depthwise Conv1d).
    ln_g = 1.0 + 0.01 * jax.random.normal(kg, (dim_in,), dtype=jnp.float32)
    ln_b = 0.01 * jax.random.normal(kb, (dim_in,), dtype=jnp.float32)
    w = jax.random.normal(kw, (dim_in, dim_out), dtype=jnp.float32) / jnp.sqrt(dim_in)
    b = 0.01 * jax.random.normal(kwb, (dim_out,), dtype=jnp.float32)
    # PyTorch depthwise Conv1d weight is (dim_out, 1, K); we store its (K, dim_out) transpose.
    conv_w = jax.random.normal(kc, (K, dim_out), dtype=jnp.float32) / jnp.sqrt(K)

    params = prepare_ffconvm_params(ln_g, ln_b, w, b, conv_w)

    out = ffconvm(x, params)
    jax.block_until_ready(out)

    ref = ffconvm_reference(x, ln_g, ln_b, w, b, conv_w)
    assert out.shape == (B, T, dim_out)
    assert jnp.allclose(out, ref, atol=2e-2, rtol=2e-2), "mismatch vs pure-JAX reference"

    print("KERNEL_OK")
</pallas_src>

<mosaic_0001>
module attributes {stable_mosaic.version = 11 : i64} {
  func.func @ffconvm_kernel(%arg0: i32, %arg1: i32, %arg2: memref<1x16x128xf32, #tpu.memory_space<vmem>>, %arg3: memref<1x1x16x128xf32, #tpu.memory_space<vmem>>, %arg4: memref<1x128xf32, #tpu.memory_space<vmem>>, %arg5: memref<1x128xf32, #tpu.memory_space<vmem>>, %arg6: memref<128x128xbf16, #tpu.memory_space<vmem>>, %arg7: memref<1x128xf32, #tpu.memory_space<vmem>>, %arg8: memref<24x128xf32, #tpu.memory_space<vmem>>, %arg9: memref<1x16x128xf32, #tpu.memory_space<vmem>>, %arg10: memref<32x128xf32, #tpu.memory_space<vmem>>) attributes {dimension_semantics = [#tpu.dimension_semantics<parallel>, #tpu.dimension_semantics<parallel>], iteration_bounds = array<i64: 2, 1>, scalar_prefetch = 0 : i64, scratch_operands = 1 : i64, tpu.core_type = #tpu.core_type<tc>, window_params = [{transform_indices = @transform_0, window_bounds = array<i64: 1, 16, 128>}, {transform_indices = @transform_1, window_bounds = array<i64: 1, 1, 16, 128>}, {pipeline_mode = #tpu.pipeline_mode<synchronous>, transform_indices = @transform_2, window_bounds = array<i64: 1, 128>}, {pipeline_mode = #tpu.pipeline_mode<synchronous>, transform_indices = @transform_3, window_bounds = array<i64: 1, 128>}, {pipeline_mode = #tpu.pipeline_mode<synchronous>, transform_indices = @transform_4, window_bounds = array<i64: 128, 128>}, {pipeline_mode = #tpu.pipeline_mode<synchronous>, transform_indices = @transform_5, window_bounds = array<i64: 1, 128>}, {pipeline_mode = #tpu.pipeline_mode<synchronous>, transform_indices = @transform_6, window_bounds = array<i64: 24, 128>}, {transform_indices = @transform_7, window_bounds = array<i64: 1, 16, 128>}]} {
    %c16_i32 = arith.constant 16 : i32
    %0 = arith.muli %arg1, %c16_i32 : i32
    %c0 = arith.constant 0 : index
    %c0_0 = arith.constant 0 : index
    %1 = vector.load %arg4[%c0, %c0_0] : memref<1x128xf32, #tpu.memory_space<vmem>>, vector<1x128xf32>
    %c0_1 = arith.constant 0 : index
    %c0_2 = arith.constant 0 : index
    %2 = vector.load %arg5[%c0_1, %c0_2] : memref<1x128xf32, #tpu.memory_space<vmem>>, vector<1x128xf32>
    %c0_3 = arith.constant 0 : index
    %c0_4 = arith.constant 0 : index
    %3 = vector.load %arg6[%c0_3, %c0_4] : memref<128x128xbf16, #tpu.memory_space<vmem>>, vector<128x128xbf16>
    %c0_5 = arith.constant 0 : index
    %c0_6 = arith.constant 0 : index
    %4 = vector.load %arg7[%c0_5, %c0_6] : memref<1x128xf32, #tpu.memory_space<vmem>>, vector<1x128xf32>
    %c0_7 = arith.constant 0 : index
    %c0_8 = arith.constant 0 : index
    %c0_9 = arith.constant 0 : index
    %5 = vector.load %arg2[%c0_7, %c0_8, %c0_9] : memref<1x16x128xf32, #tpu.memory_space<vmem>>, vector<1x16x128xf32>
    %6 = vector.shape_cast %5 : vector<1x16x128xf32> to vector<16x128xf32>
    %cst = arith.constant dense<0.000000e+00> : vector<16xf32>
    %7 = vector.multi_reduction <add>, %6, %cst [1] : vector<16x128xf32> to vector<16xf32>
    %8 = vector.shape_cast %7 : vector<16xf32> to vector<16x1xf32>
    %cst_10 = arith.constant 3.125000e-02 : f32
    %9 = vector.broadcast %cst_10 : f32 to vector<16x1xf32>
    %10 = arith.mulf %8, %9 : vector<16x1xf32>
    %11 = vector.broadcast %10 : vector<16x1xf32> to vector<16x128xf32>
    %12 = arith.subf %6, %11 : vector<16x128xf32>
    %13 = arith.mulf %12, %12 : vector<16x128xf32>
    %cst_11 = arith.constant dense<0.000000e+00> : vector<16xf32>
    %14 = vector.multi_reduction <add>, %13, %cst_11 [1] : vector<16x128xf32> to vector<16xf32>
    %15 = vector.shape_cast %14 : vector<16xf32> to vector<16x1xf32>
    %16 = arith.mulf %10, %10 : vector<16x1xf32>
    %cst_12 = arith.constant 9.600000e+01 : f32
    %17 = vector.broadcast %cst_12 : f32 to vector<16x1xf32>
    %18 = arith.mulf %17, %16 : vector<16x1xf32>
    %19 = arith.subf %15, %18 : vector<16x1xf32>
    %cst_13 = arith.constant 3.125000e-02 : f32
    %20 = vector.broadcast %cst_13 : f32 to vector<16x1xf32>
    %21 = arith.mulf %19, %20 : vector<16x1xf32>
    %cst_14 = arith.constant 0.000000e+00 : f32
    %22 = vector.broadcast %cst_14 : f32 to vector<16x1xf32>
    %23 = arith.maximumf %21, %22 : vector<16x1xf32>
    %cst_15 = arith.constant 9.99999974E-6 : f32
    %24 = vector.broadcast %cst_15 : f32 to vector<16x1xf32>
    %25 = arith.addf %23, %24 : vector<16x1xf32>
    %26 = math.rsqrt %25 : vector<16x1xf32>
    %27 = vector.broadcast %26 : vector<16x1xf32> to vector<16x128xf32>
    %28 = arith.mulf %12, %27 : vector<16x128xf32>
    %29 = vector.broadcast %1 : vector<1x128xf32> to vector<16x128xf32>
    %30 = arith.mulf %28, %29 : vector<16x128xf32>
    %31 = vector.broadcast %2 : vector<1x128xf32> to vector<16x128xf32>
    %32 = arith.addf %30, %31 : vector<16x128xf32>
    %33 = arith.truncf %32 : vector<16x128xf32> to vector<16x128xbf16>
    %cst_16 = arith.constant dense<0.000000e+00> : vector<16x128xf32>
    %34 = tpu.matmul %33, %3, %cst_16 {dimension_numbers = #tpu.dot_dimension_numbers<[1], [0], [0], [1], [0, 0, 1, 1], [], []>} : vector<16x128xbf16>, vector<128x128xbf16>, vector<16x128xf32> -> vector<16x128xf32>
    %35 = vector.broadcast %4 : vector<1x128xf32> to vector<16x128xf32>
    %36 = arith.addf %34, %35 : vector<16x128xf32>
    %37 = arith.negf %36 : vector<16x128xf32>
    %38 = math.exp %37 : vector<16x128xf32>
    %cst_17 = arith.constant 1.000000e+00 : f32
    %39 = vector.broadcast %cst_17 : f32 to vector<16x128xf32>
    %40 = arith.addf %39, %38 : vector<16x128xf32>
    %41 = arith.divf %39, %40 : vector<16x128xf32>
    %42 = arith.mulf %36, %41 : vector<16x128xf32>
    %43 = tpu.iota {dimensions = array<i32: 0>} : vector<16x1xi32>
    %44 = vector.broadcast %0 : i32 to vector<16x1xi32>
    %45 = arith.addi %43, %44 : vector<16x1xi32>
    %c16_i32_18 = arith.constant 16 : i32
    %46 = vector.broadcast %c16_i32_18 : i32 to vector<16x1xi32>
    %47 = arith.cmpi slt, %45, %46 : vector<16x1xi32>
    %cst_19 = arith.constant 0.000000e+00 : f32
    %48 = vector.shape_cast %47 : vector<16x1xi1> to vector<16x1xi1>
    %49 = vector.broadcast %48 : vector<16x1xi1> to vector<16x128xi1>
    %50 = vector.broadcast %cst_19 : f32 to vector<16x128xf32>
    %51 = arith.select %49, %42, %50 : vector<16x128xi1>, vector<16x128xf32>
    %c8 = arith.constant 8 : index
    %c0_20 = arith.constant 0 : index
    %52 = vector.load %arg10[%c8, %c0_20] : memref<32x128xf32, #tpu.memory_space<vmem>>, vector<16x128xf32>
    tpu.vector_store %arg10[%c8, %c0_20], %51 {strides = array<i32>} : memref<32x128xf32, #tpu.memory_space<vmem>>, vector<16x128xf32>,
    %c0_21 = arith.constant 0 : index
    %c0_22 = arith.constant 0 : index
    %c0_23 = arith.constant 0 : index
    %c0_24 = arith.constant 0 : index
    %53 = vector.load %arg3[%c0_21, %c0_22, %c0_23, %c0_24] : memref<1x1x16x128xf32, #tpu.memory_space<vmem>>, vector<1x1x16x128xf32>
    %54 = vector.shape_cast %53 : vector<1x1x16x128xf32> to vector<16x128xf32>
    %cst_25 = arith.constant dense<0.000000e+00> : vector<16xf32>
    %55 = vector.multi_reduction <add>, %54, %cst_25 [1] : vector<16x128xf32> to vector<16xf32>
    %56 = vector.shape_cast %55 : vector<16xf32> to vector<16x1xf32>
    %cst_26 = arith.constant 3.125000e-02 : f32
    %57 = vector.broadcast %cst_26 : f32 to vector<16x1xf32>
    %58 = arith.mulf %56, %57 : vector<16x1xf32>
    %59 = vector.broadcast %58 : vector<16x1xf32> to vector<16x128xf32>
    %60 = arith.subf %54, %59 : vector<16x128xf32>
    %61 = arith.mulf %60, %60 : vector<16x128xf32>
    %cst_27 = arith.constant dense<0.000000e+00> : vector<16xf32>
    %62 = vector.multi_reduction <add>, %61, %cst_27 [1] : vector<16x128xf32> to vector<16xf32>
    %63 = vector.shape_cast %62 : vector<16xf32> to vector<16x1xf32>
    %64 = arith.mulf %58, %58 : vector<16x1xf32>
    %cst_28 = arith.constant 9.600000e+01 : f32
    %65 = vector.broadcast %cst_28 : f32 to vector<16x1xf32>
    %66 = arith.mulf %65, %64 : vector<16x1xf32>
    %67 = arith.subf %63, %66 : vector<16x1xf32>
    %cst_29 = arith.constant 3.125000e-02 : f32
    %68 = vector.broadcast %cst_29 : f32 to vector<16x1xf32>
    %69 = arith.mulf %67, %68 : vector<16x1xf32>
    %cst_30 = arith.constant 0.000000e+00 : f32
    %70 = vector.broadcast %cst_30 : f32 to vector<16x1xf32>
    %71 = arith.maximumf %69, %70 : vector<16x1xf32>
    %cst_31 = arith.constant 9.99999974E-6 : f32
    %72 = vector.broadcast %cst_31 : f32 to vector<16x1xf32>
    %73 = arith.addf %71, %72 : vector<16x1xf32>
    %74 = math.rsqrt %73 : vector<16x1xf32>
    %75 = vector.broadcast %74 : vector<16x1xf32> to vector<16x128xf32>
    %76 = arith.mulf %60, %75 : vector<16x128xf32>
    %77 = vector.broadcast %1 : vector<1x128xf32> to vector<16x128xf32>
    %78 = arith.mulf %76, %77 : vector<16x128xf32>
    %79 = vector.broadcast %2 : vector<1x128xf32> to vector<16x128xf32>
    %80 = arith.addf %78, %79 : vector<16x128xf32>
    %81 = arith.truncf %80 : vector<16x128xf32> to vector<16x128xbf16>
    %cst_32 = arith.constant dense<0.000000e+00> : vector<16x128xf32>
    %82 = tpu.matmul %81, %3, %cst_32 {dimension_numbers = #tpu.dot_dimension_numbers<[1], [0], [0], [1], [0, 0, 1, 1], [], []>} : vector<16x128xbf16>, vector<128x128xbf16>, vector<16x128xf32> -> vector<16x128xf32>
    %83 = vector.broadcast %4 : vector<1x128xf32> to vector<16x128xf32>
    %84 = arith.addf %82, %83 : vector<16x128xf32>
    %85 = arith.negf %84 : vector<16x128xf32>
    %86 = math.exp %85 : vector<16x128xf32>
    %cst_33 = arith.constant 1.000000e+00 : f32
    %87 = vector.broadcast %cst_33 : f32 to vector<16x128xf32>
    %88 = arith.addf %87, %86 : vector<16x128xf32>
    %89 = arith.divf %87, %88 : vector<16x128xf32>
    %90 = arith.mulf %84, %89 : vector<16x128xf32>
    %91 = tpu.iota {dimensions = array<i32: 0>} : vector<8x1xi32>
    %c8_i32 = arith.constant 8 : i32
    %92 = arith.subi %0, %c8_i32 : i32
    %93 = vector.broadcast %92 : i32 to vector<8x1xi32>
    %94 = arith.addi %91, %93 : vector<8x1xi32>
    %c0_i32 = arith.constant 0 : i32
    %95 = vector.broadcast %c0_i32 : i32 to vector<8x1xi32>
    %96 = arith.cmpi sge, %94, %95 : vector<8x1xi32>
    %97 = vector.extract_strided_slice %90 {offsets = [0, 0], sizes = [8, 128], strides = [1, 1]} : vector<16x128xf32> to vector<8x128xf32>
    %cst_34 = arith.constant 0.000000e+00 : f32
    %98 = vector.shape_cast %96 : vector<8x1xi1> to vector<8x1xi1>
    %99 = vector.broadcast %98 : vector<8x1xi1> to vector<8x128xi1>
    %100 = vector.broadcast %cst_34 : f32 to vector<8x128xf32>
    %101 = arith.select %99, %97, %100 : vector<8x128xi1>, vector<8x128xf32>
    %c0_35 = arith.constant 0 : index
    %c0_36 = arith.constant 0 : index
    %102 = vector.load %arg10[%c0_35, %c0_36] : memref<32x128xf32, #tpu.memory_space<vmem>>, vector<8x128xf32>
    tpu.vector_store %arg10[%c0_35, %c0_36], %101 {strides = array<i32>} : memref<32x128xf32, #tpu.memory_space<vmem>>, vector<8x128xf32>,
    %103 = tpu.iota {dimensions = array<i32: 0>} : vector<8x1xi32>
    %c16_i32_37 = arith.constant 16 : i32
    %104 = arith.addi %0, %c16_i32_37 : i32
    %105 = vector.broadcast %104 : i32 to vector<8x1xi32>
    %106 = arith.addi %103, %105 : vector<8x1xi32>
    %c16_i32_38 = arith.constant 16 : i32
    %107 = vector.broadcast %c16_i32_38 : i32 to vector<8x1xi32>
    %108 = arith.cmpi slt, %106, %107 : vector<8x1xi32>
    %109 = vector.extract_strided_slice %90 {offsets = [8, 0], sizes = [8, 128], strides = [1, 1]} : vector<16x128xf32> to vector<8x128xf32>
    %cst_39 = arith.constant 0.000000e+00 : f32
    %110 = vector.shape_cast %108 : vector<8x1xi1> to vector<8x1xi1>
    %111 = vector.broadcast %110 : vector<8x1xi1> to vector<8x128xi1>
    %112 = vector.broadcast %cst_39 : f32 to vector<8x128xf32>
    %113 = arith.select %111, %109, %112 : vector<8x128xi1>, vector<8x128xf32>
    %c24 = arith.constant 24 : index
    %c0_40 = arith.constant 0 : index
    %114 = vector.load %arg10[%c24, %c0_40] : memref<32x128xf32, #tpu.memory_space<vmem>>, vector<8x128xf32>
    tpu.vector_store %arg10[%c24, %c0_40], %113 {strides = array<i32>} : memref<32x128xf32, #tpu.memory_space<vmem>>, vector<8x128xf32>,
    %c0_41 = arith.constant 0 : index
    %c0_42 = arith.constant 0 : index
    %115 = vector.load %arg8[%c0_41, %c0_42] : memref<24x128xf32, #tpu.memory_space<vmem>>, vector<24x128xf32>
    %c0_43 = arith.constant 0 : index
    %c0_44 = arith.constant 0 : index
    %116 = vector.load %arg10[%c0_43, %c0_44] : memref<32x128xf32, #tpu.memory_space<vmem>>, vector<32x128xf32>
    %117 = vector.extract_strided_slice %116 {offsets = [0, 0], sizes = [16, 128], strides = [1, 1]} : vector<32x128xf32> to vector<16x128xf32>
    %118 = vector.extract_strided_slice %115 {offsets = [0, 0], sizes = [1, 128], strides = [1, 1]} : vector<24x128xf32> to vector<1x128xf32>
    %119 = vector.broadcast %118 : vector<1x128xf32> to vector<16x128xf32>
    %120 = arith.mulf %117, %119 : vector<16x128xf32>
    %121 = vector.extract_strided_slice %116 {offsets = [8, 0], sizes = [16, 128], strides = [1, 1]} : vector<32x128xf32> to vector<16x128xf32>
    %122 = vector.extract_strided_slice %115 {offsets = [8, 0], sizes = [1, 128], strides = [1, 1]} : vector<24x128xf32> to vector<1x128xf32>
    %123 = vector.broadcast %122 : vector<1x128xf32> to vector<16x128xf32>
    %124 = arith.mulf %121, %123 : vector<16x128xf32>
    %125 = arith.addf %120, %124 : vector<16x128xf32>
    %126 = vector.extract_strided_slice %116 {offsets = [16, 0], sizes = [16, 128], strides = [1, 1]} : vector<32x128xf32> to vector<16x128xf32>
    %127 = vector.extract_strided_slice %115 {offsets = [16, 0], sizes = [1, 128], strides = [1, 1]} : vector<24x128xf32> to vector<1x128xf32>
    %128 = vector.broadcast %127 : vector<1x128xf32> to vector<16x128xf32>
    %129 = arith.mulf %126, %128 : vector<16x128xf32>
    %130 = arith.addf %125, %129 : vector<16x128xf32>
    %c31_i32 = arith.constant 31 : i32
    %131 = tpu.dynamic_rotate %116 by %c31_i32 dim 0 : vector<32x128xf32>, i32 -> vector<32x128xf32>
    %132 = vector.extract_strided_slice %131 {offsets = [0, 0], sizes = [16, 128], strides = [1, 1]} : vector<32x128xf32> to vector<16x128xf32>
    %133 = vector.extract_strided_slice %115 {offsets = [1, 0], sizes = [1, 128], strides = [1, 1]} : vector<24x128xf32> to vector<1x128xf32>
    %134 = vector.broadcast %133 : vector<1x128xf32> to vector<16x128xf32>
    %135 = arith.mulf %132, %134 : vector<16x128xf32>
    %136 = arith.addf %130, %135 : vector<16x128xf32>
    %137 = vector.extract_strided_slice %131 {offsets = [8, 0], sizes = [16, 128], strides = [1, 1]} : vector<32x128xf32> to vector<16x128xf32>
    %138 = vector.extract_strided_slice %115 {offsets = [9, 0], sizes = [1, 128], strides = [1, 1]} : vector<24x128xf32> to vector<1x128xf32>
    %139 = vector.broadcast %138 : vector<1x128xf32> to vector<16x128xf32>
    %140 = arith.mulf %137, %139 : vector<16x128xf32>
    %141 = arith.addf %136, %140 : vector<16x128xf32>
    %c30_i32 = arith.constant 30 : i32
    %142 = tpu.dynamic_rotate %116 by %c30_i32 dim 0 : vector<32x128xf32>, i32 -> vector<32x128xf32>
    %143 = vector.extract_strided_slice %142 {offsets = [0, 0], sizes = [16, 128], strides = [1, 1]} : vector<32x128xf32> to vector<16x128xf32>
    %144 = vector.extract_strided_slice %115 {offsets = [2, 0], sizes = [1, 128], strides = [1, 1]} : vector<24x128xf32> to vector<1x128xf32>
    %145 = vector.broadcast %144 : vector<1x128xf32> to vector<16x128xf32>
    %146 = arith.mulf %143, %145 : vector<16x128xf32>
    %147 = arith.addf %141, %146 : vector<16x128xf32>
    %148 = vector.extract_strided_slice %142 {offsets = [8, 0], sizes = [16, 128], strides = [1, 1]} : vector<32x128xf32> to vector<16x128xf32>
    %149 = vector.extract_strided_slice %115 {offsets = [10, 0], sizes = [1, 128], strides = [1, 1]} : vector<24x128xf32> to vector<1x128xf32>
    %150 = vector.broadcast %149 : vector<1x128xf32> to vector<16x128xf32>
    %151 = arith.mulf %148, %150 : vector<16x128xf32>
    %152 = arith.addf %147, %151 : vector<16x128xf32>
    %c29_i32 = arith.constant 29 : i32
    %153 = tpu.dynamic_rotate %116 by %c29_i32 dim 0 : vector<32x128xf32>, i32 -> vector<32x128xf32>
    %154 = vector.extract_strided_slice %153 {offsets = [0, 0], sizes = [16, 128], strides = [1, 1]} : vector<32x128xf32> to vector<16x128xf32>
    %155 = vector.extract_strided_slice %115 {offsets = [3, 0], sizes = [1, 128], strides = [1, 1]} : vector<24x128xf32> to vector<1x128xf32>
    %156 = vector.broadcast %155 : vector<1x128xf32> to vector<16x128xf32>
    %157 = arith.mulf %154, %156 : vector<16x128xf32>
    %158 = arith.addf %152, %157 : vector<16x128xf32>
    %159 = vector.extract_strided_slice %153 {offsets = [8, 0], sizes = [16, 128], strides = [1, 1]} : vector<32x128xf32> to vector<16x128xf32>
    %160 = vector.extract_strided_slice %115 {offsets = [11, 0], sizes = [1, 128], strides = [1, 1]} : vector<24x128xf32> to vector<1x128xf32>
    %161 = vector.broadcast %160 : vector<1x128xf32> to vector<16x128xf32>
    %162 = arith.mulf %159, %161 : vector<16x128xf32>
    %163 = arith.addf %158, %162 : vector<16x128xf32>
    %c28_i32 = arith.constant 28 : i32
    %164 = tpu.dynamic_rotate %116 by %c28_i32 dim 0 : vector<32x128xf32>, i32 -> vector<32x128xf32>
    %165 = vector.extract_strided_slice %164 {offsets = [0, 0], sizes = [16, 128], strides = [1, 1]} : vector<32x128xf32> to vector<16x128xf32>
    %166 = vector.extract_strided_slice %115 {offsets = [4, 0], sizes = [1, 128], strides = [1, 1]} : vector<24x128xf32> to vector<1x128xf32>
    %167 = vector.broadcast %166 : vector<1x128xf32> to vector<16x128xf32>
    %168 = arith.mulf %165, %167 : vector<16x128xf32>
    %169 = arith.addf %163, %168 : vector<16x128xf32>
    %170 = vector.extract_strided_slice %164 {offsets = [8, 0], sizes = [16, 128], strides = [1, 1]} : vector<32x128xf32> to vector<16x128xf32>
    %171 = vector.extract_strided_slice %115 {offsets = [12, 0], sizes = [1, 128], strides = [1, 1]} : vector<24x128xf32> to vector<1x128xf32>
    %172 = vector.broadcast %171 : vector<1x128xf32> to vector<16x128xf32>
    %173 = arith.mulf %170, %172 : vector<16x128xf32>
    %174 = arith.addf %169, %173 : vector<16x128xf32>
    %c27_i32 = arith.constant 27 : i32
    %175 = tpu.dynamic_rotate %116 by %c27_i32 dim 0 : vector<32x128xf32>, i32 -> vector<32x128xf32>
    %176 = vector.extract_strided_slice %175 {offsets = [0, 0], sizes = [16, 128], strides = [1, 1]} : vector<32x128xf32> to vector<16x128xf32>
    %177 = vector.extract_strided_slice %115 {offsets = [5, 0], sizes = [1, 128], strides = [1, 1]} : vector<24x128xf32> to vector<1x128xf32>
    %178 = vector.broadcast %177 : vector<1x128xf32> to vector<16x128xf32>
    %179 = arith.mulf %176, %178 : vector<16x128xf32>
    %180 = arith.addf %174, %179 : vector<16x128xf32>
    %181 = vector.extract_strided_slice %175 {offsets = [8, 0], sizes = [16, 128], strides = [1, 1]} : vector<32x128xf32> to vector<16x128xf32>
    %182 = vector.extract_strided_slice %115 {offsets = [13, 0], sizes = [1, 128], strides = [1, 1]} : vector<24x128xf32> to vector<1x128xf32>
    %183 = vector.broadcast %182 : vector<1x128xf32> to vector<16x128xf32>
    %184 = arith.mulf %181, %183 : vector<16x128xf32>
    %185 = arith.addf %180, %184 : vector<16x128xf32>
    %c26_i32 = arith.constant 26 : i32
    %186 = tpu.dynamic_rotate %116 by %c26_i32 dim 0 : vector<32x128xf32>, i32 -> vector<32x128xf32>
    %187 = vector.extract_strided_slice %186 {offsets = [0, 0], sizes = [16, 128], strides = [1, 1]} : vector<32x128xf32> to vector<16x128xf32>
    %188 = vector.extract_strided_slice %115 {offsets = [6, 0], sizes = [1, 128], strides = [1, 1]} : vector<24x128xf32> to vector<1x128xf32>
    %189 = vector.broadcast %188 : vector<1x128xf32> to vector<16x128xf32>
    %190 = arith.mulf %187, %189 : vector<16x128xf32>
    %191 = arith.addf %185, %190 : vector<16x128xf32>
    %192 = vector.extract_strided_slice %186 {offsets = [8, 0], sizes = [16, 128], strides = [1, 1]} : vector<32x128xf32> to vector<16x128xf32>
    %193 = vector.extract_strided_slice %115 {offsets = [14, 0], sizes = [1, 128], strides = [1, 1]} : vector<24x128xf32> to vector<1x128xf32>
    %194 = vector.broadcast %193 : vector<1x128xf32> to vector<16x128xf32>
    %195 = arith.mulf %192, %194 : vector<16x128xf32>
    %196 = arith.addf %191, %195 : vector<16x128xf32>
    %c25_i32 = arith.constant 25 : i32
    %197 = tpu.dynamic_rotate %116 by %c25_i32 dim 0 : vector<32x128xf32>, i32 -> vector<32x128xf32>
    %198 = vector.extract_strided_slice %197 {offsets = [0, 0], sizes = [16, 128], strides = [1, 1]} : vector<32x128xf32> to vector<16x128xf32>
    %199 = vector.extract_strided_slice %115 {offsets = [7, 0], sizes = [1, 128], strides = [1, 1]} : vector<24x128xf32> to vector<1x128xf32>
    %200 = vector.broadcast %199 : vector<1x128xf32> to vector<16x128xf32>
    %201 = arith.mulf %198, %200 : vector<16x128xf32>
    %202 = arith.addf %196, %201 : vector<16x128xf32>
    %203 = vector.extract_strided_slice %197 {offsets = [8, 0], sizes = [16, 128], strides = [1, 1]} : vector<32x128xf32> to vector<16x128xf32>
    %204 = vector.extract_strided_slice %115 {offsets = [15, 0], sizes = [1, 128], strides = [1, 1]} : vector<24x128xf32> to vector<1x128xf32>
    %205 = vector.broadcast %204 : vector<1x128xf32> to vector<16x128xf32>
    %206 = arith.mulf %203, %205 : vector<16x128xf32>
    %207 = arith.addf %202, %206 : vector<16x128xf32>
    %c0_45 = arith.constant 0 : index
    %c0_46 = arith.constant 0 : index
    %c0_47 = arith.constant 0 : index
    %208 = vector.load %arg9[%c0_45, %c0_46, %c0_47] : memref<1x16x128xf32, #tpu.memory_space<vmem>>, vector<1x16x128xf32>
    %209 = vector.shape_cast %208 : vector<1x16x128xf32> to vector<16x128xf32>
    %210 = vector.shape_cast %207 : vector<16x128xf32> to vector<1x16x128xf32>
    tpu.vector_store %arg9[%c0_45, %c0_46, %c0_47], %210 {strides = array<i32>} : memref<1x16x128xf32, #tpu.memory_space<vmem>>, vector<1x16x128xf32>,
    return
  }
  func.func @transform_0(%arg0: i32, %arg1: i32) -> (i32, i32, i32) {
    %c0_i32 = arith.constant 0 : i32
    %c0_i32_0 = arith.constant 0 : i32
    return %arg0, %arg1, %c0_i32 : i32, i32, i32
  }
  func.func @transform_1(%arg0: i32, %arg1: i32) -> (i32, i32, i32, i32) {
    %c0_i32 = arith.constant 0 : i32
    %c0_i32_0 = arith.constant 0 : i32
    %c0_i32_1 = arith.constant 0 : i32
    return %arg0, %arg1, %c0_i32, %c0_i32_0 : i32, i32, i32, i32
  }
  func.func @transform_2(%arg0: i32, %arg1: i32) -> (i32, i32) {
    %c0_i32 = arith.constant 0 : i32
    %c0_i32_0 = arith.constant 0 : i32
    %c0_i32_1 = arith.constant 0 : i32
    return %c0_i32, %c0_i32_0 : i32, i32
  }
  func.func @transform_3(%arg0: i32, %arg1: i32) -> (i32, i32) {
    %c0_i32 = arith.constant 0 : i32
    %c0_i32_0 = arith.constant 0 : i32
    %c0_i32_1 = arith.constant 0 : i32
    return %c0_i32, %c0_i32_0 : i32, i32
  }
  func.func @transform_4(%arg0: i32, %arg1: i32) -> (i32, i32) {
    %c0_i32 = arith.constant 0 : i32
    %c0_i32_0 = arith.constant 0 : i32
    %c0_i32_1 = arith.constant 0 : i32
    return %c0_i32, %c0_i32_0 : i32, i32
  }
  func.func @transform_5(%arg0: i32, %arg1: i32) -> (i32, i32) {
    %c0_i32 = arith.constant 0 : i32
    %c0_i32_0 = arith.constant 0 : i32
    %c0_i32_1 = arith.constant 0 : i32
    return %c0_i32, %c0_i32_0 : i32, i32
  }
  func.func @transform_6(%arg0: i32, %arg1: i32) -> (i32, i32) {
    %c0_i32 = arith.constant 0 : i32
    %c0_i32_0 = arith.constant 0 : i32
    %c0_i32_1 = arith.constant 0 : i32
    return %c0_i32, %c0_i32_0 : i32, i32
  }
  func.func @transform_7(%arg0: i32, %arg1: i32) -> (i32, i32, i32) {
    %c0_i32 = arith.constant 0 : i32
    %c0_i32_0 = arith.constant 0 : i32
    return %arg0, %arg1, %c0_i32 : i32, i32, i32
  }
}

</mosaic_0001>

<llo_original>
// kernel: tpu_custom_call.1
$region0: #{tpu_custom_call.1}
  #allocation0 [shape = 'u32[]', space=smem, size = 0x4, offset = 0x4, fixed_abs, tag = 'smem constant byte address 0x4 - core index']
  #allocation1 [shape = 'u32[144,128]{1,0:T(1,128)}', space=vmem, size = 0x12000, scoped, tag = 'internal scratch']
  #allocation2 [shape = 'f32[32,128]{1,0:T(8,128)}', space=vmem, size = 0x4000, scoped, tag = 'scratch operand']
  %s0 = inlined_call_operand.hbm [shape: f32[2,16,128], index: 0, kind: input, shape index: {}]
  %s1 = inlined_call_operand.hbm [shape: f32[2,1,16,128], index: 1, kind: input, shape index: {}]
  %s2 = inlined_call_operand.vmem [shape: f32[1,128], index: 2, kind: input, shape index: {}]
  %s3 = inlined_call_operand.vmem [shape: f32[1,128], index: 3, kind: input, shape index: {}]
  %s4 = inlined_call_operand.hbm [shape: bf16[128,128], index: 4, kind: input, shape index: {}]
  %s5 = inlined_call_operand.vmem [shape: f32[1,128], index: 5, kind: input, shape index: {}]
  %s6 = inlined_call_operand.hbm [shape: f32[24,128], index: 6, kind: input, shape index: {}]
  %s7 = inlined_call_operand.hbm [shape: f32[2,16,128], index: 7, kind: output, shape index: {}]
  %s8 = sld [smem:[#allocation0]]
  $region77: #{tpu_custom_call.1} parent=0
    _
  %s10 = ssub.s32 1, %s8
  %s11 = scalar_select 0, %s10, %s8
  $region1: #{tpu_custom_call.1} parent=0
    #allocation3 [shape = 'u8[16384]{0}', space=vmem, size = 0x4000, scoped, tag = 'input window, operand 0']
    #allocation4 [shape = 's32[2]{0}', space=sflag, size = 0x8, scoped, tag = 'scoped memory for tpu_custom_call.1']
    #allocation5 [shape = 's32[2]{0}', space=sflag, size = 0x8, scoped, tag = 'scoped memory for tpu_custom_call.1']
    #allocation6 [shape = 'u8[16384]{0}', space=vmem, size = 0x4000, scoped, tag = 'input window, operand 1']
    #allocation7 [shape = 's32[2]{0}', space=sflag, size = 0x8, scoped, tag = 'scoped memory for tpu_custom_call.1']
    #allocation8 [shape = 'u8[32768]{0}', space=vmem, size = 0x8000, scoped, tag = 'input window, operand 4, single buffered']
    #allocation9 [shape = 'u8[12288]{0}', space=vmem, size = 0x3000, scoped, tag = 'input window, operand 6, single buffered']
    #allocation10 [shape = 's32[1]{0}', space=sflag, size = 0x4, scoped, tag = 'scoped memory for tpu_custom_call.1']
    #allocation11 [shape = 'u8[16384]{0}', space=vmem, size = 0x4000, scoped, tag = 'output window, operand 0']
    %12 = vsyncpa [#allocation4], 0
    %s13 = scalar_lea.sflag [#allocation4], 1
    %14 = vsyncpa %s13, 0
    %15 = vsyncpa [#allocation7], 0
    %s16 = scalar_lea.sflag [#allocation7], 1
    %17 = vsyncpa %s16, 0
    %18 = vsyncpa [#allocation10], 0
    %19 = vsyncpa [#allocation5], 0
    %s20 = scalar_lea.sflag [#allocation5], 1
    %21 = vsyncpa %s20, 0
    loop: start=0, step=1, limit=4
    $region2: #{tpu_custom_call.1} parent=1 // loop_pre_header
      _
    $region3: #{tpu_custom_call.1} parent=1 // loop_header
      %s23 = sphi 0, %s27
      %p24 = scmp.ge.s32.totalorder %s23, 4
      %s30 = sphi 0, %s42
      %s31 = sphi 0, %s38
      %s32 = sphi 0, %s30
      %s33 = sphi 0, %s31
      %s34 = sphi 0, %s32
      %s35 = sphi 0, %s33
      %s47 = sphi 0, %s49
      %s50 = sphi 0, %s47
      %s51 = sphi 0, %s50
      %s67 = sphi 0, %s51
      %s75 = sphi 0, %s77
      %s78 = sphi 0, %s75
      %s79 = sphi 0, %s78
      %s95 = sphi 0, %s79
      %s99 = sphi 0, %s99
      %s101 = sphi 0, %s99
      %s102 = sphi 0, %s101
      %s116 = sphi 0, %s102
      %s120 = sphi 0, %s120
      %s122 = sphi 0, %s120
      %s123 = sphi 0, %s122
      %s137 = sphi 0, %s123
      %s141 = sphi 0, %s141
      %s143 = sphi 0, %s141
      %s144 = sphi 0, %s143
      %s158 = sphi 0, %s144
      %s162 = sphi 0, %s162
      %s164 = sphi 0, %s162
      %s165 = sphi 0, %s164
      %s179 = sphi 0, %s165
      %s183 = sphi 0, %s183
      %s185 = sphi 0, %s183
      %s186 = sphi 0, %s185
      %s200 = sphi 0, %s186
      %s208 = sphi 0, %s210
      %s211 = sphi 0, %s208
      %s212 = sphi 0, %s211
      %s228 = sphi 0, %s212
    $region4: #{tpu_custom_call.1} parent=1 // loop_header_branch
      %26 = sbr.rel (%p24) target = $region8
    $region5: #{tpu_custom_call.1} parent=1 // loop_body
      %s28 = ssub.s32 %s23, 1
      %s29 = ssub.s32 %s23, 2
      %s36 = sadd.s32 1, %s31
      %p37 = scmp.ge.s32.totalorder %s36, 1
      %s38 = scalar_select %p37, 0, %s36
      %s39 = sadd.s32 1, %s30
      %s40 = scalar_select %p37, %s39, %s30
      %p41 = scmp.ge.s32.totalorder %s40, 2
      %s42 = scalar_select %p41, 0, %s40
      %s43 = ssub.s32 %s30, %s42
      %s44 = ssub.s32 %s31, %s38
      %s45 = sor.u32 %s43, %s44
      %p46 = scmp.eq.s32.totalorder %s45, 0
      %s48 = sadd.s32 %s47, 1
      %s49 = scalar_select %p46, %s47, %s48
      %p52 = pneg %p46
      %p53 = scmp.eq.s32.totalorder %s23, 1
      %p54 = por %p52, %p53
      %p55 = scmp.ne.s32.totalorder %s47, %s50
      %p56 = scmp.eq.s32.totalorder %s23, 0
      %p57 = por %p55, %p56
      %p58 = scmp.ne.s32.totalorder %s47, %s50
      %p59 = scmp.eq.s32.totalorder %s28, 1
      %p60 = por %p58, %p59
      %p61 = scmp.ne.s32.totalorder %s50, %s51
      %p62 = scmp.eq.s32.totalorder %s28, 0
      %p63 = por %p61, %p62
      %p64 = scmp.ne.s32.totalorder %s50, %s51
      %p65 = scmp.eq.s32.totalorder %s29, 1
      %p66 = por %p64, %p65
      %p68 = scmp.ne.s32.totalorder %s51, %s67
      %p69 = scmp.eq.s32.totalorder %s29, 0
      %p70 = por %p68, %p69
      %s71 = ssub.s32 %s30, %s42
      %s72 = ssub.s32 %s31, %s38
      %s73 = sor.u32 %s71, %s72
      %p74 = scmp.eq.s32.totalorder %s73, 0
      %s76 = sadd.s32 %s75, 1
      %s77 = scalar_select %p74, %s75, %s76
      %p80 = pneg %p74
      %p81 = scmp.eq.s32.totalorder %s23, 1
      %p82 = por %p80, %p81
      %p83 = scmp.ne.s32.totalorder %s75, %s78
      %p84 = scmp.eq.s32.totalorder %s23, 0
      %p85 = por %p83, %p84
      %p86 = scmp.ne.s32.totalorder %s75, %s78
      %p87 = scmp.eq.s32.totalorder %s28, 1
      %p88 = por %p86, %p87
      %p89 = scmp.ne.s32.totalorder %s78, %s79
      %p90 = scmp.eq.s32.totalorder %s28, 0
      %p91 = por %p89, %p90
      %p92 = scmp.ne.s32.totalorder %s78, %s79
      %p93 = scmp.eq.s32.totalorder %s29, 1
      %p94 = por %p92, %p93
      %p96 = scmp.ne.s32.totalorder %s79, %s95
      %p97 = scmp.eq.s32.totalorder %s29, 0
      %p98 = por %p96, %p97
      %s100 = sadd.s32 %s99, 1
      %p103 = scmp.eq.s32.totalorder %s23, 1
      %p104 = scmp.ne.s32.totalorder %s99, %s101
      %p105 = scmp.eq.s32.totalorder %s23, 0
      %p106 = por %p104, %p105
      %p107 = scmp.ne.s32.totalorder %s99, %s101
      %p108 = scmp.eq.s32.totalorder %s28, 1
      %p109 = por %p107, %p108
      %p110 = scmp.ne.s32.totalorder %s101, %s102
      %p111 = scmp.eq.s32.totalorder %s28, 0
      %p112 = por %p110, %p111
      %p113 = scmp.ne.s32.totalorder %s101, %s102
      %p114 = scmp.eq.s32.totalorder %s29, 1
      %p115 = por %p113, %p114
      %p117 = scmp.ne.s32.totalorder %s102, %s116
      %p118 = scmp.eq.s32.totalorder %s29, 0
      %p119 = por %p117, %p118
      %s121 = sadd.s32 %s120, 1
      %p124 = scmp.eq.s32.totalorder %s23, 1
      %p125 = scmp.ne.s32.totalorder %s120, %s122
      %p126 = scmp.eq.s32.totalorder %s23, 0
      %p127 = por %p125, %p126
      %p128 = scmp.ne.s32.totalorder %s120, %s122
      %p129 = scmp.eq.s32.totalorder %s28, 1
      %p130 = por %p128, %p129
      %p131 = scmp.ne.s32.totalorder %s122, %s123
      %p132 = scmp.eq.s32.totalorder %s28, 0
      %p133 = por %p131, %p132
      %p134 = scmp.ne.s32.totalorder %s122, %s123
      %p135 = scmp.eq.s32.totalorder %s29, 1
      %p136 = por %p134, %p135
      %p138 = scmp.ne.s32.totalorder %s123, %s137
      %p139 = scmp.eq.s32.totalorder %s29, 0
      %p140 = por %p138, %p139
      %s142 = sadd.s32 %s141, 1
      %p145 = scmp.eq.s32.totalorder %s23, 1
      %p146 = scmp.ne.s32.totalorder %s141, %s143
      %p147 = scmp.eq.s32.totalorder %s23, 0
      %p148 = por %p146, %p147
      %p149 = scmp.ne.s32.totalorder %s141, %s143
      %p150 = scmp.eq.s32.totalorder %s28, 1
      %p151 = por %p149, %p150
      %p152 = scmp.ne.s32.totalorder %s143, %s144
      %p153 = scmp.eq.s32.totalorder %s28, 0
      %p154 = por %p152, %p153
      %p155 = scmp.ne.s32.totalorder %s143, %s144
      %p156 = scmp.eq.s32.totalorder %s29, 1
      %p157 = por %p155, %p156
      %p159 = scmp.ne.s32.totalorder %s144, %s158
      %p160 = scmp.eq.s32.totalorder %s29, 0
      %p161 = por %p159, %p160
      %s163 = sadd.s32 %s162, 1
      %p166 = scmp.eq.s32.totalorder %s23, 1
      %p167 = scmp.ne.s32.totalorder %s162, %s164
      %p168 = scmp.eq.s32.totalorder %s23, 0
      %p169 = por %p167, %p168
      %p170 = scmp.ne.s32.totalorder %s162, %s164
      %p171 = scmp.eq.s32.totalorder %s28, 1
      %p172 = por %p170, %p171
      %p173 = scmp.ne.s32.totalorder %s164, %s165
      %p174 = scmp.eq.s32.totalorder %s28, 0
      %p175 = por %p173, %p174
      %p176 = scmp.ne.s32.totalorder %s164, %s165
      %p177 = scmp.eq.s32.totalorder %s29, 1
      %p178 = por %p176, %p177
      %p180 = scmp.ne.s32.totalorder %s165, %s179
      %p181 = scmp.eq.s32.totalorder %s29, 0
      %p182 = por %p180, %p181
      %s184 = sadd.s32 %s183, 1
      %p187 = scmp.eq.s32.totalorder %s23, 1
      %p188 = scmp.ne.s32.totalorder %s183, %s185
      %p189 = scmp.eq.s32.totalorder %s23, 0
      %p190 = por %p188, %p189
      %p191 = scmp.ne.s32.totalorder %s183, %s185
      %p192 = scmp.eq.s32.totalorder %s28, 1
      %p193 = por %p191, %p192
      %p194 = scmp.ne.s32.totalorder %s185, %s186
      %p195 = scmp.eq.s32.totalorder %s28, 0
      %p196 = por %p194, %p195
      %p197 = scmp.ne.s32.totalorder %s185, %s186
      %p198 = scmp.eq.s32.totalorder %s29, 1
      %p199 = por %p197, %p198
      %p201 = scmp.ne.s32.totalorder %s186, %s200
      %p202 = scmp.eq.s32.totalorder %s29, 0
      %p203 = por %p201, %p202
      %s204 = ssub.s32 %s30, %s42
      %s205 = ssub.s32 %s31, %s38
      %s206 = sor.u32 %s204, %s205
      %p207 = scmp.eq.s32.totalorder %s206, 0
      %s209 = sadd.s32 %s208, 1
      %s210 = scalar_select %p207, %s208, %s209
      %p213 = pneg %p207
      %p214 = scmp.eq.s32.totalorder %s23, 1
      %p215 = por %p213, %p214
      %p216 = scmp.ne.s32.totalorder %s208, %s211
      %p217 = scmp.eq.s32.totalorder %s23, 0
      %p218 = por %p216, %p217
      %p219 = scmp.ne.s32.totalorder %s208, %s211
      %p220 = scmp.eq.s32.totalorder %s28, 1
      %p221 = por %p219, %p220
      %p222 = scmp.ne.s32.totalorder %s211, %s212
      %p223 = scmp.eq.s32.totalorder %s28, 0
      %p224 = por %p222, %p223
      %p225 = scmp.ne.s32.totalorder %s211, %s212
      %p226 = scmp.eq.s32.totalorder %s29, 1
      %p227 = por %p225, %p226
      %p229 = scmp.ne.s32.totalorder %s212, %s228
      %p230 = scmp.eq.s32.totalorder %s29, 0
      %p231 = por %p229, %p230
      %p232 = scmp.le.s32.totalorder 1, %s23
      %p233 = scmp.lt.s32.totalorder %s23, 3
      %p234 = pnand %p232, %p233
      %p235 = pneg %p234
      // Predicated region
      $region9: #{tpu_custom_call.1} parent=5 // pred_check
        _
      $region10: #{tpu_custom_call.1} parent=5 // pred_check_branch
        %237 = sbr.rel (%p234) target = $region12
      $region11: #{tpu_custom_call.1} parent=5 // pred_region
        %s238 = ssub.s32 %s23, 1
        // Predicated region
        $region13: #{tpu_custom_call.1} parent=11 // pred_check
          %p239 = pneg %p112
        $region14: #{tpu_custom_call.1} parent=11 // pred_check_branch
          %241 = sbr.rel (%p239) target = $region16
        $region15: #{tpu_custom_call.1} parent=11 // pred_region
          _
        $region16: #{tpu_custom_call.1} parent=11 // pred_fallthru
          _
        // Predicated region
        $region17: #{tpu_custom_call.1} parent=11 // pred_check
          %p242 = pneg %p133
        $region18: #{tpu_custom_call.1} parent=11 // pred_check_branch
          %244 = sbr.rel (%p242) target = $region20
        $region19: #{tpu_custom_call.1} parent=11 // pred_region
          _
        $region20: #{tpu_custom_call.1} parent=11 // pred_fallthru
          _
        // Predicated region
        $region21: #{tpu_custom_call.1} parent=11 // pred_check
          %p245 = pneg %p154
        $region22: #{tpu_custom_call.1} parent=11 // pred_check_branch
          %247 = sbr.rel (%p245) target = $region24
        $region23: #{tpu_custom_call.1} parent=11 // pred_region
          %s249 = ssub.s32 1024, 1024
          %250 = vsyncadd [#allocation7], %s249
          %s251 = sshll.u32 [#allocation8], 4
          %s252 = int_to_ptr.vmem [resolvable:$true] %s251
          %257 = dma.hbm_to_vmem [thread:$0]  %s4, 1024, %s252, [#allocation7], 64, 64, 4
        $region24: #{tpu_custom_call.1} parent=11 // pred_fallthru
          _
        // Predicated region
        $region25: #{tpu_custom_call.1} parent=11 // pred_check
          %p258 = pneg %p175
        $region26: #{tpu_custom_call.1} parent=11 // pred_check_branch
          %260 = sbr.rel (%p258) target = $region28
        $region27: #{tpu_custom_call.1} parent=11 // pred_region
          _
        $region28: #{tpu_custom_call.1} parent=11 // pred_fallthru
          _
        // Predicated region
        $region29: #{tpu_custom_call.1} parent=11 // pred_check
          %p261 = pneg %p196
        $region30: #{tpu_custom_call.1} parent=11 // pred_check_branch
          %263 = sbr.rel (%p261) target = $region32
        $region31: #{tpu_custom_call.1} parent=11 // pred_region
          %s265 = ssub.s32 384, 384
          %266 = vsyncadd [#allocation10], %s265
          %s267 = sshll.u32 [#allocation9], 4
          %s268 = int_to_ptr.vmem [resolvable:$true] %s267
          %273 = dma.hbm_to_vmem [thread:$0]  %s6, 384, %s268, [#allocation10], 128, 128, 8
        $region32: #{tpu_custom_call.1} parent=11 // pred_fallthru
          _
      $region12: #{tpu_custom_call.1} parent=5 // pred_fallthru
        _
      %p274 = scmp.lt.s32.totalorder %s23, 2
      // Predicated region
      $region33: #{tpu_custom_call.1} parent=5 // pred_check
        %p275 = pneg %p274
      $region34: #{tpu_custom_call.1} parent=5 // pred_check_branch
        %277 = sbr.rel (%p275) target = $region36
      $region35: #{tpu_custom_call.1} parent=5 // pred_region
        // Predicated region
        $region37: #{tpu_custom_call.1} parent=35 // pred_check
          %p278 = pneg %p57
        $region38: #{tpu_custom_call.1} parent=35 // pred_check_branch
          %280 = sbr.rel (%p278) target = $region40
        $region39: #{tpu_custom_call.1} parent=35 // pred_region
          %s281 = sand.u32 %s47, 1
          %s282 = scalar_lea.sflag [#allocation4], %s281
          %s283 = sand.u32 %s47, 1
          %s284 = smul.addr %s283, 16
          %s285 = scalar_lea.vmem [#allocation3], %s284
          %s286 = smul.u32 2, %s31
          %s288 = ssub.s32 256, 256
          %289 = vsyncadd %s282, %s288
          %s290 = smul.addr %s30, 2
          %s291 = sadd.s32 %s286, %s290
          %s292 = smul.addr %s291, 128
          %s293 = scalar_lea.hbm %s0, %s292
          %s294 = sshll.u32 %s285, 4
          %s295 = int_to_ptr.vmem [resolvable:$true] %s294
          %300 = dma.hbm_to_vmem [thread:$0]  %s293, 256, %s295, %s282, 128, 128, 8
        $region40: #{tpu_custom_call.1} parent=35 // pred_fallthru
          _
        // Predicated region
        $region41: #{tpu_custom_call.1} parent=35 // pred_check
          %p301 = pneg %p85
        $region42: #{tpu_custom_call.1} parent=35 // pred_check_branch
          %303 = sbr.rel (%p301) target = $region44
        $region43: #{tpu_custom_call.1} parent=35 // pred_region
          %s304 = sand.u32 %s23, 1
          %s305 = scalar_lea.sflag [#allocation7], %s304
          %s306 = sand.u32 %s75, 1
          %s307 = smul.addr %s306, 16
          %s308 = scalar_lea.vmem [#allocation6], %s307
          %s310 = ssub.s32 256, 256
          %311 = vsyncadd %s305, %s310
          %s312 = smul.addr %s31, 2
          %s313 = smul.addr %s30, 2
          %s314 = sadd.s32 %s312, %s313
          %s315 = smul.addr %s314, 128
          %s316 = scalar_lea.hbm %s1, %s315
          %s317 = sshll.u32 %s308, 4
          %s318 = int_to_ptr.vmem [resolvable:$true] %s317
          %323 = dma.hbm_to_vmem [thread:$0]  %s316, 256, %s318, %s305, 128, 128, 8
        $region44: #{tpu_custom_call.1} parent=35 // pred_fallthru
          _
      $region36: #{tpu_custom_call.1} parent=5 // pred_fallthru
        _
      %p324 = scmp.le.s32.totalorder 1, %s23
      %p325 = scmp.lt.s32.totalorder %s23, 3
      %p326 = pnand %p324, %p325
      %p327 = pneg %p326
      // Predicated region
      $region45: #{tpu_custom_call.1} parent=5 // pred_check
        _
      $region46: #{tpu_custom_call.1} parent=5 // pred_check_branch
        %329 = sbr.rel (%p326) target = $region48
      $region47: #{tpu_custom_call.1} parent=5 // pred_region
        %s330 = ssub.s32 %s23, 1
        %s331 = sand.u32 %s50, 1
        %s332 = scalar_lea.sflag [#allocation4], %s331
        %s333 = sand.u32 %s50, 1
        %s334 = smul.addr %s333, 16
        %s335 = scalar_lea.vmem [#allocation3], %s334
        // Predicated region
        $region49: #{tpu_custom_call.1} parent=47 // pred_check
          %p336 = pneg %p63
        $region50: #{tpu_custom_call.1} parent=47 // pred_check_branch
          %338 = sbr.rel (%p336) target = $region52
        $region51: #{tpu_custom_call.1} parent=47 // pred_region
          %339 = dma.done %s332, 256
        $region52: #{tpu_custom_call.1} parent=47 // pred_fallthru
          _
        %s340 = sand.u32 %s28, 1
        %s341 = scalar_lea.sflag [#allocation7], %s340
        %s342 = sand.u32 %s78, 1
        %s343 = smul.addr %s342, 16
        %s344 = scalar_lea.vmem [#allocation6], %s343
        // Predicated region
        $region53: #{tpu_custom_call.1} parent=47 // pred_check
          %p345 = pneg %p91
        $region54: #{tpu_custom_call.1} parent=47 // pred_check_branch
          %347 = sbr.rel (%p345) target = $region56
        $region55: #{tpu_custom_call.1} parent=47 // pred_region
          %348 = dma.done %s341, 256
        $region56: #{tpu_custom_call.1} parent=47 // pred_fallthru
          _
        // Predicated region
        $region57: #{tpu_custom_call.1} parent=47 // pred_check
          %p349 = pneg %p154
        $region58: #{tpu_custom_call.1} parent=47 // pred_check_branch
          %351 = sbr.rel (%p349) target = $region60
        $region59: #{tpu_custom_call.1} parent=47 // pred_region
          %352 = dma.done [#allocation7], 1024
        $region60: #{tpu_custom_call.1} parent=47 // pred_fallthru
          _
        // Predicated region
        $region61: #{tpu_custom_call.1} parent=47 // pred_check
          %p353 = pneg %p196
        $region62: #{tpu_custom_call.1} parent=47 // pred_check_branch
          %355 = sbr.rel (%p353) target = $region64
        $region63: #{tpu_custom_call.1} parent=47 // pred_region
          %356 = dma.done [#allocation10], 384
        $region64: #{tpu_custom_call.1} parent=47 // pred_fallthru
          _
        %s357 = sand.u32 %s50, 1
        %s358 = scalar_lea.sflag [#allocation4], %s357
        %s359 = sand.u32 %s50, 1
        %s360 = smul.addr %s359, 16
        %s361 = scalar_lea.vmem [#allocation3], %s360
        %p362 = pneg %p63
        %p363 = pneg %p60
        %s364 = sand.u32 %s28, 1
        %s365 = scalar_lea.sflag [#allocation7], %s364
        %s366 = sand.u32 %s78, 1
        %s367 = smul.addr %s366, 16
        %s368 = scalar_lea.vmem [#allocation6], %s367
        %p369 = pneg %p91
        %p370 = pneg %p88
        %p371 = pneg %p112
        %p372 = pneg %p109
        %p373 = pneg %p133
        %p374 = pneg %p130
        %p375 = pneg %p154
        %p376 = pneg %p151
        %p377 = pneg %p175
        %p378 = pneg %p172
        %p379 = pneg %p196
        %p380 = pneg %p193
        %p381 = pneg %p224
        %p382 = pneg %p221
        %s383 = sand.u32 %s211, 1
        %s384 = scalar_lea.sflag [#allocation5], %s383
        %s385 = sand.u32 %s211, 1
        %s386 = smul.addr %s385, 16
        %s387 = scalar_lea.vmem [#allocation11], %s386
        %s388 = smul.u32 2, %s33
        %s389 = smul.u32 2, %s33
        %s391 = smul.u32 %s33, 16
        %v392 = vld [vmem:[%s2] sm:$0x1]
        %v393 = vld [vmem:[%s3] sm:$0x1]
        %v394 = vld [vmem:[#allocation8] sm:$0xf]
        %v395 = vld [vmem:[#allocation8 + $0x4] sm:$0xf]
        %v396 = vld [vmem:[#allocation8 + $0x8] sm:$0xf]
        %v397 = vld [vmem:[#allocation8 + $0xc] sm:$0xf]
        %v398 = vld [vmem:[#allocation8 + $0x10] sm:$0xf]
        %v399 = vld [vmem:[#allocation8 + $0x14] sm:$0xf]
        %v400 = vld [vmem:[#allocation8 + $0x18] sm:$0xf]
        %v401 = vld [vmem:[#allocation8 + $0x1c] sm:$0xf]
        %v402 = vld [vmem:[#allocation8 + $0x20] sm:$0xf]
        %v403 = vld [vmem:[#allocation8 + $0x24] sm:$0xf]
        %v404 = vld [vmem:[#allocation8 + $0x28] sm:$0xf]
        %v405 = vld [vmem:[#allocation8 + $0x2c] sm:$0xf]
        %v406 = vld [vmem:[#allocation8 + $0x30] sm:$0xf]
        %v407 = vld [vmem:[#allocation8 + $0x34] sm:$0xf]
        %v408 = vld [vmem:[#allocation8 + $0x38] sm:$0xf]
        %v409 = vld [vmem:[#allocation8 + $0x3c] sm:$0xf]
        %v410 = vld [vmem:[%s5] sm:$0x1]
        %v411 = vld [vmem:[%s335] sm:$0xff]
        %v412 = vld [vmem:[%s335 + $0x8] sm:$0xff]
        %413 = vadd.xlane.f32.xlu0 %v411
        %v414 = vpop.xlane.xlu0 %413
        %415 = vadd.xlane.f32.xlu0 %v412
        %v416 = vpop.xlane.xlu0 %415
        %v417 = vmul.f32 %v414, 0.03125
        %v418 = vmul.f32 %v416, 0.03125
        %v419 = vsub.f32 %v411, %v417
        %v420 = vsub.f32 %v412, %v418
        %v421 = vmul.f32 %v419, %v419
        %v422 = vmul.f32 %v420, %v420
        %423 = vadd.xlane.f32.xlu0 %v421
        %v424 = vpop.xlane.xlu0 %423
        %425 = vadd.xlane.f32.xlu0 %v422
        %v426 = vpop.xlane.xlu0 %425
        %v427 = vmul.f32 %v417, %v417
        %v428 = vmul.f32 %v418, %v418
        %v429 = vmul.f32 %v427, 96.0
        %v430 = vmul.f32 %v428, 96.0
        %v431 = vsub.f32 %v424, %v429
        %v432 = vsub.f32 %v426, %v430
        %v433 = vmul.f32 %v431, 0.03125
        %v434 = vmul.f32 %v432, 0.03125
        %v435 = vmax.f32 %v433, 0.0
        %v436 = vmax.f32 %v434, 0.0
        %v437 = vadd.f32 %v435, 1e-05
        %v438 = vadd.f32 %v436, 1e-05
        %v439 = vrsqrt.pop %v437
        %v440 = vrsqrt.pop %v438
        %v441 = vmul.f32 %v419, %v439
        %v442 = vmul.f32 %v420, %v440
        %v444 = vlaneseq
        %v445 = vshrl.u32 %v444, 7
        %v446 = vsub.s32 0, %v445
        %v447 = vrot.slane %v392, %v446
        %v449 = vmul.f32 %v441, %v447
        %v450 = vmul.f32 %v442, %v447
        %v452 = vlaneseq
        %v453 = vshrl.u32 %v452, 7
        %v454 = vsub.s32 0, %v453
        %v455 = vrot.slane %v393, %v454
        %v457 = vadd.f32 %v449, %v455
        %v458 = vadd.f32 %v450, %v455
        %v459 = vpack.c.bf16 %v458, %v457
        %v461 = vlaneseq
        %v462 = vshrl.u32 %v461, 7
        %v463 = vsub.s32 0, %v462
        %v464 = vrot.slane %v410, %v463
        %v482 = vunpack.c.l.b16 %v394
        %v483 = vunpack.c.l.b16 %v395
        %v484 = vunpack.c.l.b16 %v396
        %v485 = vunpack.c.l.b16 %v397
        %v486 = vunpack.c.l.b16 %v398
        %v487 = vunpack.c.l.b16 %v399
        %v488 = vunpack.c.l.b16 %v400
        %v489 = vunpack.c.l.b16 %v401
        %v490 = vunpack.c.l.b16 %v402
        %v491 = vunpack.c.l.b16 %v403
        %v492 = vunpack.c.l.b16 %v404
        %v493 = vunpack.c.l.b16 %v405
        %v494 = vunpack.c.l.b16 %v406
        %v495 = vunpack.c.l.b16 %v407
        %v496 = vunpack.c.l.b16 %v408
        %v497 = vunpack.c.l.b16 %v409
        %v498 = vpack.c.b16 %v483, %v482
        %v499 = vpack.c.b16 %v485, %v484
        %v500 = vpack.c.b16 %v487, %v486
        %v501 = vpack.c.b16 %v489, %v488
        %v502 = vpack.c.b16 %v491, %v490
        %v503 = vpack.c.b16 %v493, %v492
        %v504 = vpack.c.b16 %v495, %v494
        %v505 = vpack.c.b16 %v497, %v496
        %514 = vmatprep.subr.bf16.mxu0 0
        %515 = vmatpush1.bf16.msra.mxu0 %v498
        %516 = vmatprep.subr.bf16.mxu0 0
        %517 = vmatpush1.bf16.msra.mxu0 %v499
        %518 = vmatprep.subr.bf16.mxu0 0
        %519 = vmatpush1.bf16.msra.mxu0 %v500
        %520 = vmatprep.subr.bf16.mxu0 0
        %521 = vmatpush1.bf16.msra.mxu0 %v501
        %522 = vmatprep.subr.bf16.mxu0 0
        %523 = vmatpush1.bf16.msra.mxu0 %v502
        %524 = vmatprep.subr.bf16.mxu0 0
        %525 = vmatpush1.bf16.msra.mxu0 %v503
        %526 = vmatprep.subr.bf16.mxu0 0
        %527 = vmatpush1.bf16.msra.mxu0 %v504
        %528 = vmatprep.subr.bf16.mxu0 0
        %529 = vmatpush1.bf16.msra.mxu0 %v505
        %530 = vmatprep.subr.bf16.mxu0 0
        %531 = vmatpush1.bf16.msra.mxu0 0
        %532 = vmatprep.subr.bf16.mxu0 0
        %533 = vmatpush1.bf16.msra.mxu0 0
        %534 = vmatprep.subr.bf16.mxu0 0
        %535 = vmatpush1.bf16.msra.mxu0 0
        %536 = vmatprep.subr.bf16.mxu0 0
        %537 = vmatpush1.bf16.msra.mxu0 0
        %538 = vmatprep.subr.bf16.mxu0 0
        %539 = vmatpush1.bf16.msra.mxu0 0
        %540 = vmatprep.subr.bf16.mxu0 0
        %541 = vmatpush1.bf16.msra.mxu0 0
        %542 = vmatprep.subr.bf16.mxu0 0
        %543 = vmatpush1.bf16.msra.mxu0 0
        %544 = vmatprep.subr.bf16.mxu0 0
        %545 = vmatpush1.bf16.msra.mxu0 0
        %546 = vmatprep.mubr.bf16.mxu0 0
        %547 = vmatmul.mubr.bf16.gmra.mrb[0].mxu0 %v459
        %v548 = vpop.f32.mrb[0].mxu0
        %v549 = vadd.f32 %v464, %v548
        %v550 = vpop.f32.mrb[0].mxu0
        %v551 = vpop.f32.mrb[0].mxu0
        %v552 = vadd.f32 %v464, %v551
        %v553 = vpop.f32.mrb[0].mxu0
        %554 = vdwg.mxu0
        %v555 = vxor.u32 %v549, 2147483648
        %v556 = vxor.u32 %v552, 2147483648
        %v557 = vmul.f32 %v555, 1.442695
        %v558 = vpow.pop %v557
        %v559 = vmul.f32 %v556, 1.442695
        %v560 = vpow.pop %v559
        %v561 = vadd.f32 %v558, 1.0
        %v562 = vadd.f32 %v560, 1.0
        %v563 = vrcp.pop %v561
        %v564 = vmul.f32 1.0, %v563
        %v565 = vrcp.pop %v562
        %v566 = vmul.f32 1.0, %v565
        %v567 = vmul.f32 %v549, %v564
        %v568 = vmul.f32 %v552, %v566
        %v569 = vlaneseq
        %v570 = vshrl.u32 %v569, 7
        %v571 = vadd.s32 %v570, 8
        %v572 = vstv %s391
        %v573 = vadd.s32 %v570, %v572
        %v574 = vadd.s32 %v571, %v572
        %vm575 = vcmp.lt.s32.totalorder %v573, 16
        %vm576 = vcmp.lt.s32.totalorder %v574, 16
        %v577 = vsel %vm575, 1, 0
        %v578 = vsel %vm576, 1, 0
        %vm579 = vcmp.eq.s32.totalorder %v577, 1
        %vm580 = vcmp.eq.s32.totalorder %v578, 1
        %v581 = vsel %vm579, %v567, 0.0
        %v582 = vsel %vm580, %v568, 0.0
        %583 = vst [vmem:[#allocation2 + $0x8] sm:$0xff] %v581
        %584 = vst [vmem:[#allocation2 + $0x10] sm:$0xff] %v582
        %v585 = vld [vmem:[%s344] sm:$0xff]
        %v586 = vld [vmem:[%s344 + $0x8] sm:$0xff]
        %587 = vadd.xlane.f32.xlu0 %v585
        %v588 = vpop.xlane.xlu0 %587
        %589 = vadd.xlane.f32.xlu0 %v586
        %v590 = vpop.xlane.xlu0 %589
        %v591 = vmul.f32 %v588, 0.03125
        %v592 = vmul.f32 %v590, 0.03125
        %v593 = vsub.f32 %v585, %v591
        %v594 = vsub.f32 %v586, %v592
        %v595 = vmul.f32 %v593, %v593
        %v596 = vmul.f32 %v594, %v594
        %597 = vadd.xlane.f32.xlu0 %v595
        %v598 = vpop.xlane.xlu0 %597
        %599 = vadd.xlane.f32.xlu0 %v596
        %v600 = vpop.xlane.xlu0 %599
        %v601 = vmul.f32 %v591, %v591
        %v602 = vmul.f32 %v592, %v592
        %v603 = vmul.f32 %v601, 96.0
        %v604 = vmul.f32 %v602, 96.0
        %v605 = vsub.f32 %v598, %v603
        %v606 = vsub.f32 %v600, %v604
        %v607 = vmul.f32 %v605, 0.03125
        %v608 = vmul.f32 %v606, 0.03125
        %v609 = vmax.f32 %v607, 0.0
        %v610 = vmax.f32 %v608, 0.0
        %v611 = vadd.f32 %v609, 1e-05
        %v612 = vadd.f32 %v610, 1e-05
        %v613 = vrsqrt.pop %v611
        %v614 = vrsqrt.pop %v612
        %v615 = vmul.f32 %v593, %v613
        %v616 = vmul.f32 %v594, %v614
        %v617 = vmul.f32 %v615, %v447
        %v618 = vmul.f32 %v616, %v447
        %v619 = vadd.f32 %v617, %v455
        %v620 = vadd.f32 %v618, %v455
        %v621 = vpack.c.bf16 %v620, %v619
        %622 = vmatprep.subr.bf16.mxu0 0
        %623 = vmatpush1.bf16.msra.mxu0 %v498
        %624 = vmatprep.subr.bf16.mxu0 0
        %625 = vmatpush1.bf16.msra.mxu0 %v499
        %626 = vmatprep.subr.bf16.mxu0 0
        %627 = vmatpush1.bf16.msra.mxu0 %v500
        %628 = vmatprep.subr.bf16.mxu0 0
        %629 = vmatpush1.bf16.msra.mxu0 %v501
        %630 = vmatprep.subr.bf16.mxu0 0
        %631 = vmatpush1.bf16.msra.mxu0 %v502
        %632 = vmatprep.subr.bf16.mxu0 0
        %633 = vmatpush1.bf16.msra.mxu0 %v503
        %634 = vmatprep.subr.bf16.mxu0 0
        %635 = vmatpush1.bf16.msra.mxu0 %v504
        %636 = vmatprep.subr.bf16.mxu0 0
        %637 = vmatpush1.bf16.msra.mxu0 %v505
        %638 = vmatprep.subr.bf16.mxu0 0
        %639 = vmatpush1.bf16.msra.mxu0 0
        %640 = vmatprep.subr.bf16.mxu0 0
        %641 = vmatpush1.bf16.msra.mxu0 0
        %642 = vmatprep.subr.bf16.mxu0 0
        %643 = vmatpush1.bf16.msra.mxu0 0
        %644 = vmatprep.subr.bf16.mxu0 0
        %645 = vmatpush1.bf16.msra.mxu0 0
        %646 = vmatprep.subr.bf16.mxu0 0
        %647 = vmatpush1.bf16.msra.mxu0 0
        %648 = vmatprep.subr.bf16.mxu0 0
        %649 = vmatpush1.bf16.msra.mxu0 0
        %650 = vmatprep.subr.bf16.mxu0 0
        %651 = vmatpush1.bf16.msra.mxu0 0
        %652 = vmatprep.subr.bf16.mxu0 0
        %653 = vmatpush1.bf16.msra.mxu0 0
        %654 = vmatprep.mubr.bf16.mxu0 0
        %655 = vmatmul.mubr.bf16.gmra.mrb[0].mxu0 %v621
        %v656 = vpop.f32.mrb[0].mxu0
        %v657 = vadd.f32 %v464, %v656
        %v658 = vpop.f32.mrb[0].mxu0
        %v659 = vpop.f32.mrb[0].mxu0
        %v660 = vadd.f32 %v464, %v659
        %v661 = vpop.f32.mrb[0].mxu0
        %662 = vdwg.mxu0
        %v663 = vxor.u32 %v657, 2147483648
        %v664 = vxor.u32 %v660, 2147483648
        %v665 = vmul.f32 %v663, 1.442695
        %v666 = vpow.pop %v665
        %v667 = vmul.f32 %v664, 1.442695
        %v668 = vpow.pop %v667
        %v669 = vadd.f32 %v666, 1.0
        %v670 = vadd.f32 %v668, 1.0
        %v671 = vrcp.pop %v669
        %v672 = vmul.f32 1.0, %v671
        %v673 = vrcp.pop %v670
        %v674 = vmul.f32 1.0, %v673
        %v675 = vmul.f32 %v657, %v672
        %v676 = vmul.f32 %v660, %v674
        %s677 = ssub.s32 %s391, 8
        %v678 = vstv %s677
        %v679 = vadd.s32 %v570, %v678
        %vm680 = vcmp.ge.s32.totalorder %v679, 0
        %v681 = vsel %vm680, 1, 0
        %vm682 = vcmp.eq.s32.totalorder %v681, 1
        %v683 = vsel %vm682, %v675, 0.0
        %684 = vst [vmem:[#allocation2] sm:$0xff] %v683
        %s685 = sadd.s32 %s391, 16
        %v686 = vstv %s685
        %v687 = vadd.s32 %v570, %v686
        %vm688 = vcmp.lt.s32.totalorder %v687, 16
        %v689 = vsel %vm688, 1, 0
        %vm690 = vcmp.eq.s32.totalorder %v689, 1
        %v691 = vsel %vm690, %v676, 0.0
        %692 = vst [vmem:[#allocation2 + $0x18] sm:$0xff] %v691
        %v693 = vld [vmem:[#allocation9] sm:$0xff]
        %v694 = vld [vmem:[#allocation9 + $0x8] sm:$0xff]
        %v695 = vld [vmem:[#allocation9 + $0x10] sm:$0xff]
        %v696 = vld [vmem:[#allocation2] sm:$0xff]
        %v697 = vld [vmem:[#allocation2 + $0x8] sm:$0xff]
        %v698 = vld [vmem:[#allocation2 + $0x10] sm:$0xff]
        %v699 = vld [vmem:[#allocation2 + $0x18] sm:$0xff]
        %v700 = vlaneseq
        %v701 = vshrl.u32 %v700, 7
        %v702 = vsub.s32 0, %v701
        %v703 = vrot.slane %v693, %v702
        %v704 = vmul.f32 %v696, %v703
        %v705 = vmul.f32 %v697, %v703
        %v706 = vlaneseq
        %v707 = vshrl.u32 %v706, 7
        %v708 = vsub.s32 0, %v707
        %v709 = vrot.slane %v694, %v708
        %v710 = vmul.f32 %v697, %v709
        %v711 = vmul.f32 %v698, %v709
        %v712 = vadd.f32 %v704, %v710
        %v713 = vadd.f32 %v705, %v711
        %v714 = vlaneseq
        %v715 = vshrl.u32 %v714, 7
        %v716 = vsub.s32 0, %v715
        %v717 = vrot.slane %v695, %v716
        %v718 = vmul.f32 %v698, %v717
        %v719 = vmul.f32 %v699, %v717
        %v720 = vadd.f32 %v712, %v718
        %v721 = vadd.f32 %v713, %v719
        %v722 = vrot.slane %v696, 1
        %v723 = vrot.slane %v697, 1
        %v724 = vrot.slane %v698, 1
        %v725 = vrot.slane %v699, 1
        %vm726 = vcmp.lt.s32.totalorder %v570, 7
        %v727 = vsel %vm726, %v724, %v725
        %v728 = vsel %vm726, %v723, %v724
        %v729 = vsel %vm726, %v722, %v723
        %v730 = vlaneseq
        %v731 = vshrl.u32 %v730, 7
        %v732 = vsub.s32 1, %v731
        %v733 = vrot.slane %v693, %v732
        %v734 = vmul.f32 %v729, %v733
        %v735 = vmul.f32 %v728, %v733
        %v736 = vadd.f32 %v720, %v734
        %v737 = vadd.f32 %v721, %v735
        %v738 = vlaneseq
        %v739 = vshrl.u32 %v738, 7
        %v740 = vsub.s32 1, %v739
        %v741 = vrot.slane %v694, %v740
        %v742 = vmul.f32 %v728, %v741
        %v743 = vmul.f32 %v727, %v741
        %v744 = vadd.f32 %v736, %v742
        %v745 = vadd.f32 %v737, %v743
        %v746 = vrot.slane %v696, 2
        %v747 = vrot.slane %v697, 2
        %v748 = vrot.slane %v698, 2
        %v749 = vrot.slane %v699, 2
        %vm750 = vcmp.lt.s32.totalorder %v570, 6
        %v751 = vsel %vm750, %v748, %v749
        %v752 = vsel %vm750, %v747, %v748
        %v753 = vsel %vm750, %v746, %v747
        %v754 = vlaneseq
        %v755 = vshrl.u32 %v754, 7
        %v756 = vsub.s32 2, %v755
        %v757 = vrot.slane %v693, %v756
        %v758 = vmul.f32 %v753, %v757
        %v759 = vmul.f32 %v752, %v757
        %v760 = vadd.f32 %v744, %v758
        %v761 = vadd.f32 %v745, %v759
        %v762 = vlaneseq
        %v763 = vshrl.u32 %v762, 7
        %v764 = vsub.s32 2, %v763
        %v765 = vrot.slane %v694, %v764
        %v766 = vmul.f32 %v752, %v765
        %v767 = vmul.f32 %v751, %v765
        %v768 = vadd.f32 %v760, %v766
        %v769 = vadd.f32 %v761, %v767
        %v770 = vrot.slane %v696, 3
        %v771 = vrot.slane %v697, 3
        %v772 = vrot.slane %v698, 3
        %v773 = vrot.slane %v699, 3
        %vm774 = vcmp.lt.s32.totalorder %v570, 5
        %v775 = vsel %vm774, %v772, %v773
        %v776 = vsel %vm774, %v771, %v772
        %v777 = vsel %vm774, %v770, %v771
        %v778 = vlaneseq
        %v779 = vshrl.u32 %v778, 7
        %v780 = vsub.s32 3, %v779
        %v781 = vrot.slane %v693, %v780
        %v782 = vmul.f32 %v777, %v781
        %v783 = vmul.f32 %v776, %v781
        %v784 = vadd.f32 %v768, %v782
        %v785 = vadd.f32 %v769, %v783
        %v786 = vlaneseq
        %v787 = vshrl.u32 %v786, 7
        %v788 = vsub.s32 3, %v787
        %v789 = vrot.slane %v694, %v788
        %v790 = vmul.f32 %v776, %v789
        %v791 = vmul.f32 %v775, %v789
        %v792 = vadd.f32 %v784, %v790
        %v793 = vadd.f32 %v785, %v791
        %v794 = vrot.slane %v696, 4
        %v795 = vrot.slane %v697, 4
        %v796 = vrot.slane %v698, 4
        %v797 = vrot.slane %v699, 4
        %vm798 = vcmp.lt.s32.totalorder %v570, 4
        %v799 = vsel %vm798, %v796, %v797
        %v800 = vsel %vm798, %v795, %v796
        %v801 = vsel %vm798, %v794, %v795
        %v802 = vlaneseq
        %v803 = vshrl.u32 %v802, 7
        %v804 = vsub.s32 4, %v803
        %v805 = vrot.slane %v693, %v804
        %v806 = vmul.f32 %v801, %v805
        %v807 = vmul.f32 %v800, %v805
        %v808 = vadd.f32 %v792, %v806
        %v809 = vadd.f32 %v793, %v807
        %v810 = vlaneseq
        %v811 = vshrl.u32 %v810, 7
        %v812 = vsub.s32 4, %v811
        %v813 = vrot.slane %v694, %v812
        %v814 = vmul.f32 %v800, %v813
        %v815 = vmul.f32 %v799, %v813
        %v816 = vadd.f32 %v808, %v814
        %v817 = vadd.f32 %v809, %v815
        %v818 = vrot.slane %v696, 5
        %v819 = vrot.slane %v697, 5
        %v820 = vrot.slane %v698, 5
        %v821 = vrot.slane %v699, 5
        %vm822 = vcmp.lt.s32.totalorder %v570, 3
        %v823 = vsel %vm822, %v820, %v821
        %v824 = vsel %vm822, %v819, %v820
        %v825 = vsel %vm822, %v818, %v819
        %v826 = vlaneseq
        %v827 = vshrl.u32 %v826, 7
        %v828 = vsub.s32 5, %v827
        %v829 = vrot.slane %v693, %v828
        %v830 = vmul.f32 %v825, %v829
        %v831 = vmul.f32 %v824, %v829
        %v832 = vadd.f32 %v816, %v830
        %v833 = vadd.f32 %v817, %v831
        %v834 = vlaneseq
        %v835 = vshrl.u32 %v834, 7
        %v836 = vsub.s32 5, %v835
        %v837 = vrot.slane %v694, %v836
        %v838 = vmul.f32 %v824, %v837
        %v839 = vmul.f32 %v823, %v837
        %v840 = vadd.f32 %v832, %v838
        %v841 = vadd.f32 %v833, %v839
        %v842 = vrot.slane %v696, 6
        %v843 = vrot.slane %v697, 6
        %v844 = vrot.slane %v698, 6
        %v845 = vrot.slane %v699, 6
        %vm846 = vcmp.lt.s32.totalorder %v570, 2
        %v847 = vsel %vm846, %v844, %v845
        %v848 = vsel %vm846, %v843, %v844
        %v849 = vsel %vm846, %v842, %v843
        %v850 = vlaneseq
        %v851 = vshrl.u32 %v850, 7
        %v852 = vsub.s32 6, %v851
        %v853 = vrot.slane %v693, %v852
        %v854 = vmul.f32 %v849, %v853
        %v855 = vmul.f32 %v848, %v853
        %v856 = vadd.f32 %v840, %v854
        %v857 = vadd.f32 %v841, %v855
        %v858 = vlaneseq
        %v859 = vshrl.u32 %v858, 7
        %v860 = vsub.s32 6, %v859
        %v861 = vrot.slane %v694, %v860
        %v862 = vmul.f32 %v848, %v861
        %v863 = vmul.f32 %v847, %v861
        %v864 = vadd.f32 %v856, %v862
        %v865 = vadd.f32 %v857, %v863
        %v866 = vrot.slane %v696, 7
        %v867 = vrot.slane %v697, 7
        %v868 = vrot.slane %v698, 7
        %v869 = vrot.slane %v699, 7
        %vm870 = vcmp.lt.s32.totalorder %v570, 1
        %v871 = vsel %vm870, %v868, %v869
        %v872 = vsel %vm870, %v867, %v868
        %v873 = vsel %vm870, %v866, %v867
        %v874 = vlaneseq
        %v875 = vshrl.u32 %v874, 7
        %v876 = vsub.s32 7, %v875
        %v877 = vrot.slane %v693, %v876
        %v878 = vmul.f32 %v873, %v877
        %v879 = vmul.f32 %v872, %v877
        %v880 = vadd.f32 %v864, %v878
        %v881 = vadd.f32 %v865, %v879
        %v882 = vlaneseq
        %v883 = vshrl.u32 %v882, 7
        %v884 = vsub.s32 7, %v883
        %v885 = vrot.slane %v694, %v884
        %v886 = vmul.f32 %v872, %v885
        %v887 = vmul.f32 %v871, %v885
        %v888 = vadd.f32 %v880, %v886
        %v889 = vadd.f32 %v881, %v887
        %890 = vst [vmem:[%s387] sm:$0xff] %v888
        %891 = vst [vmem:[%s387 + $0x8] sm:$0xff] %v889
        %s892 = sand.u32 %s211, 1
        %s893 = scalar_lea.sflag [#allocation5], %s892
        %s894 = sand.u32 %s211, 1
        %s895 = smul.addr %s894, 16
        %s896 = scalar_lea.vmem [#allocation11], %s895
        // Predicated region
        $region65: #{tpu_custom_call.1} parent=47 // pred_check
          %p897 = pneg %p221
        $region66: #{tpu_custom_call.1} parent=47 // pred_check_branch
          %899 = sbr.rel (%p897) target = $region68
        $region67: #{tpu_custom_call.1} parent=47 // pred_region
          %s900 = smul.u32 2, %s33
          %s902 = ssub.s32 256, 256
          %903 = vsyncadd %s893, %s902
          %s904 = smul.addr %s32, 2
          %s905 = sadd.s32 %s900, %s904
          %s906 = smul.addr %s905, 128
          %s907 = scalar_lea.hbm %s7, %s906
          %s908 = sshll.u32 %s896, 4
          %s909 = int_to_ptr.vmem [resolvable:$true] %s908
          %914 = dma.vmem_to_hbm [thread:$0]  %s909, 256, %s907, %s893, 128, 128, 8
        $region68: #{tpu_custom_call.1} parent=47 // pred_fallthru
          _
      $region48: #{tpu_custom_call.1} parent=5 // pred_fallthru
        _
      %p915 = scmp.le.s32.totalorder 2, %s23
      // Predicated region
      $region69: #{tpu_custom_call.1} parent=5 // pred_check
        %p916 = pneg %p915
      $region70: #{tpu_custom_call.1} parent=5 // pred_check_branch
        %918 = sbr.rel (%p916) target = $region72
      $region71: #{tpu_custom_call.1} parent=5 // pred_region
        %s919 = ssub.s32 %s23, 2
        // Predicated region
        $region73: #{tpu_custom_call.1} parent=71 // pred_check
          %p920 = pneg %p227
        $region74: #{tpu_custom_call.1} parent=71 // pred_check_branch
          %922 = sbr.rel (%p920) target = $region76
        $region75: #{tpu_custom_call.1} parent=71 // pred_region
          %s923 = sand.u32 %s212, 1
          %s924 = scalar_lea.sflag [#allocation5], %s923
          %s925 = sand.u32 %s212, 1
          %s926 = smul.addr %s925, 16
          %s927 = scalar_lea.vmem [#allocation11], %s926
          %928 = dma.done %s924, 256
        $region76: #{tpu_custom_call.1} parent=71 // pred_fallthru
          _
      $region72: #{tpu_custom_call.1} parent=5 // pred_fallthru
        _
    $region6: #{tpu_custom_call.1} parent=1 // loop_footer
      %s27 = sadd.s32 1, %s23
    $region7: #{tpu_custom_call.1} parent=1 // loop_footer_branch
      %22 = sbr.rel target = $region3
    $region8: #{tpu_custom_call.1} parent=1 // loop_exit
      _
    %929 = vsyncpa [#allocation4], 1
    %s930 = scalar_lea.sflag [#allocation4], 1
    %931 = vsyncpa %s930, 1
    %932 = vsyncpa [#allocation7], 1
    %s933 = scalar_lea.sflag [#allocation7], 1
    %934 = vsyncpa %s933, 1
    %935 = vsyncpa [#allocation10], 1
    %936 = vsyncpa [#allocation5], 1
    %s937 = scalar_lea.sflag [#allocation5], 1
    %938 = vsyncpa %s937, 1

</llo_original>
